<compile_context>
chip_gen: v7x
topology: tpu7x:2x2x1
jax: 0.10.0
libtpu: 0.0.40
codegen_flags: <defaults>
</compile_context>

<pallas_src>
import jax
import jax.numpy as jnp
from jax.experimental import pallas as pl

# ----------------------------- configuration -------------------------------
B = 2                      # batch
C, H, W = 3, 16, 16        # image channels / spatial
IN_DIM = C * H * W         # 768 flattened image
FEAT = 32                  # backbone global feature dim
MANO_NCOMPS = 45           # args.use_pca == False -> mano_ncomps = 45
ROT = 3                    # args.root_rot_mode == 'axisang' -> rot = 3
NUM_POSE = MANO_NCOMPS + ROT          # 48 pose tokens
NUM_BETAS = 10                        # 10 beta tokens
T = NUM_POSE + NUM_BETAS              # 58 reference tokens
D_IN = FEAT + 1                       # ref-param channel (1) + image feature
HIDDEN = 64                           # synthetic trans_encoder hidden width
VERT_NUM = 64                         # synthetic full mesh vertex count
VERT_SUB_NUM = 16                     # cfg.VERT_SUB_NUM
JOIN_NUM = 8                          # cfg.JOIN_NUM
N_PRED = VERT_SUB_NUM + JOIN_NUM      # 24 (input rows of cam_param_fc2)
CAM_H = 150                           # cam_param_fc2 output width

SLAB_VS = VERT_SUB_NUM * 3            # 48
SLAB_J = JOIN_NUM * 3                 # 24
SLAB_V = VERT_NUM * 3                 # 192
SLAB = SLAB_VS + SLAB_J + SLAB_V      # 264
OUT_COLS = SLAB + 1 + 3               # + encoder scalar + cam params = 268


def _full_spec(shape):
    """BlockSpec covering the whole array (single block, grid=(1,))."""
    return pl.BlockSpec(shape, lambda i: (0,) * len(shape))


# ------------------------------- fused kernel --------------------------------
def _fused_kernel(x_ref, p1_ref, p2_ref, o_ref):
    # p1 = [W1 (768,64); b1 (1,64); pad]   bf16
    # p2 = [W2 (64,268); b2 (1,268); pad]  bf16
    x = x_ref[...].astype(jnp.bfloat16)                               # (B, 768)

    w1 = p1_ref[0:IN_DIM, :]                                          # (768, 64)
    b1 = p1_ref[IN_DIM:IN_DIM + 1, :].astype(jnp.float32)             # (1, 64)
    # backbone + encoder layer-1 (pre-composed):  h = relu(x @ W1 + b1)
    h = jnp.maximum(
        jnp.dot(x, w1, preferred_element_type=jnp.float32) + b1, 0.0)  # (B, 64) f32

    w2 = p2_ref[0:HIDDEN, :]                                          # (64, 268)
    b2 = p2_ref[HIDDEN:HIDDEN + 1, :].astype(jnp.float32)             # (1, 268)
    # encoder layer-2 + mano(+downsample) + cam head, all folded into W2/b2
    # (valid only because the synthetic encoder is token-invariant).
    o = jnp.dot(h.astype(jnp.bfloat16), w2,
                preferred_element_type=jnp.float32) + b2              # (B, 268) f32

    o_ref[...] = o.astype(o_ref.dtype)


def fused_forward_call(x_flat, pack1, pack2):
    batch = x_flat.shape[0]
    return pl.pallas_call(
        _fused_kernel,
        out_shape=jax.ShapeDtypeStruct((batch, OUT_COLS), jnp.float32),
        grid=(1,),
        in_specs=[
            _full_spec(x_flat.shape),
            _full_spec(pack1.shape),
            _full_spec(pack2.shape),
        ],
        out_specs=_full_spec((batch, OUT_COLS)),
    )(x_flat, pack1, pack2)


# ----------------------------- parameters -----------------------------------
def init_raw_params(key):
    """Raw synthetic parameters of the external modules + this module's fc1/2/3."""
    ks = jax.random.split(key, 8)
    s = 0.05
    f32 = jnp.float32
    raw = dict(
        backbone_w=jax.random.normal(ks[0], (IN_DIM, FEAT), f32) * s,
        backbone_b=jnp.zeros((1, FEAT), f32),
        enc_w1=jax.random.normal(ks[1], (D_IN, HIDDEN), f32) * s,
        enc_b1=jnp.zeros((1, HIDDEN), f32),
        enc_w2=jax.random.normal(ks[2], (HIDDEN, 1), f32) * s,
        enc_b2=jnp.zeros((1, 1), f32),
        mano_w=jax.random.normal(ks[3], (T, (VERT_NUM + JOIN_NUM) * 3), f32) * s,
        mano_b=jnp.zeros((1, (VERT_NUM + JOIN_NUM) * 3), f32),
        cam_fc1_w=jax.random.normal(ks[4], (3, 1), f32) * s,
        cam_fc1_b=jnp.zeros((1, 1), f32),
        cam_fc2_w=jax.random.normal(ks[5], (N_PRED, CAM_H), f32) * s,
        cam_fc2_b=jnp.zeros((1, CAM_H), f32),
        cam_fc3_w=jax.random.normal(ks[6], (CAM_H, 3), f32) * s,
        cam_fc3_b=jnp.zeros((1, 3), f32),
    )
    # mesh_sampler.downsample: fixed averaging matrix (VERT_SUB_NUM, VERT_NUM)
    group = VERT_NUM // VERT_SUB_NUM
    raw["down_mat"] = jnp.kron(jnp.eye(VERT_SUB_NUM, dtype=f32),
                               jnp.full((1, group), 1.0 / group, dtype=f32))
    return raw


def fold_params(raw):
    """Host-side algebraic folds -> two packed bf16 weight slabs."""
    f32 = jnp.float32

    # (1) backbone folded into encoder layer-1 (ref-param channel is zero at
    #     inference, so row 0 of enc_w1 is dropped).
    enc_w1_img = raw["enc_w1"][1:, :]                                  # (FEAT, HIDDEN)
    w1 = raw["backbone_w"] @ enc_w1_img                                # (768, HIDDEN)
    b1 = raw["backbone_b"] @ enc_w1_img + raw["enc_b1"]                # (1, HIDDEN)

    # (2) mesh_sampler.downsample folded into mano -> slab [verts_sub|joints|verts]
    w_v = raw["mano_w"][:, :VERT_NUM * 3].reshape(T, VERT_NUM, 3)
    w_j = raw["mano_w"][:, VERT_NUM * 3:]
    w_vs = jnp.einsum("tvc,sv->tsc", w_v, raw["down_mat"]).reshape(T, SLAB_VS)
    mano_w_f = jnp.concatenate([w_vs, w_j, w_v.reshape(T, SLAB_V)], axis=1)
    b_v = raw["mano_b"][:, :VERT_NUM * 3].reshape(VERT_NUM, 3)
    b_j = raw["mano_b"][:, VERT_NUM * 3:]
    b_vs = (raw["down_mat"] @ b_v).reshape(1, SLAB_VS)
    mano_b_f = jnp.concatenate([b_vs, b_j, b_v.reshape(1, SLAB_V)], axis=1)

    # (3) cam_param_fc1 (Linear(3,1)) folded into fc2 over flattened predictions
    #     predictions = [verts_sub | joints] (rows), coords minor -> cols n*3+k.
    cam_w12 = jnp.einsum("k,nh->nkh", raw["cam_fc1_w"][:, 0],
                         raw["cam_fc2_w"]).reshape(N_PRED * 3, CAM_H)
    cam_b12 = (raw["cam_fc1_b"][0, 0] * raw["cam_fc2_w"].sum(0, keepdims=True)
               + raw["cam_fc2_b"])

    # (4) token-invariant encoder => entire post-encoder path is affine in s:
    #     out_cols = s * alpha + beta.
    alpha_slab = mano_w_f.sum(axis=0, keepdims=True)                   # (1, SLAB)
    beta_slab = mano_b_f
    alpha_cam = alpha_slab[:, :SLAB_VS + SLAB_J] @ cam_w12 @ raw["cam_fc3_w"]
    beta_cam = ((beta_slab[:, :SLAB_VS + SLAB_J] @ cam_w12 + cam_b12)
                @ raw["cam_fc3_w"] + raw["cam_fc3_b"])
    alpha = jnp.concatenate([alpha_slab, jnp.ones((1, 1), f32), alpha_cam], axis=1)
    beta = jnp.concatenate([beta_slab, jnp.zeros((1, 1), f32), beta_cam], axis=1)

    # (5) fold the affine map into encoder layer-2: o = h @ W2 + b2
    w2 = raw["enc_w2"] @ alpha                                         # (HIDDEN, 268)
    b2 = raw["enc_b2"][0, 0] * alpha + beta                            # (1, 268)

    # (6) pack into two contiguous bf16 slabs (weights + bias rows, even rows).
    pack1 = jnp.concatenate([w1, b1, jnp.zeros((1, HIDDEN), f32)],
                            axis=0).astype(jnp.bfloat16)               # (770, 64)
    pack2 = jnp.concatenate([w2, b2, jnp.zeros((1, OUT_COLS), f32)],
                            axis=0).astype(jnp.bfloat16)               # (66, 268)
    return pack1, pack2


# ------------------------------ forward --------------------------------------
def trans_recon_forward(pack1, pack2, images):
    """Mirrors TransRecon_Network.forward (is_train=False, output_attentions=False)."""
    batch = images.shape[0]

    # TODO(synk): is_train meta-mask blending path not exercised (is_train=False).
    # TODO(synk): output_attentions=True path (hidden_states, att) not modeled.
    # NOTE: the s-affine fold is only valid while the synthetic trans_encoder
    #       stand-in is token-invariant; a real per-token encoder would need
    #       the unfolded (per-token) formulation.

    x_flat = images.reshape(batch, IN_DIM)
    slab = fused_forward_call(x_flat, pack1, pack2)        # (B, 268) lane-dense

    pred_vertices_sub = slab[:, :SLAB_VS].reshape(batch, VERT_SUB_NUM, 3)
    pred_3d_joints = slab[:, SLAB_VS:SLAB_VS + SLAB_J].reshape(batch, JOIN_NUM, 3)
    pred_vertices = slab[:, SLAB_VS + SLAB_J:SLAB].reshape(batch, VERT_NUM, 3)
    enc_scalar = slab[:, SLAB:SLAB + 1]                    # (B, 1) encoder output
    cam_params = slab[:, SLAB + 1:]                        # (B, 3)

    pred_pose = jnp.broadcast_to(enc_scalar[:, None, :], (batch, NUM_POSE, 1))
    pred_betas = jnp.broadcast_to(enc_scalar[:, None, :], (batch, NUM_BETAS, 1))

    return (cam_params, pred_3d_joints, pred_vertices_sub,
            pred_vertices, pred_pose, pred_betas)


# --------------------- un-folded pure-JAX reference ---------------------------
def reference_forward(raw, images):
    b = images.shape[0]
    x = images.reshape(b, IN_DIM)
    img_feat = x @ raw["backbone_w"] + raw["backbone_b"]                 # (B, FEAT)
    feats = jnp.concatenate(
        [jnp.zeros((b, T, 1), jnp.float32),
         jnp.broadcast_to(img_feat[:, None, :], (b, T, FEAT))], axis=2)  # (B,T,33)
    h = jnp.maximum(feats @ raw["enc_w1"] + raw["enc_b1"], 0.0)
    s = h @ raw["enc_w2"] + raw["enc_b2"]                                # (B,T,1)
    pred_pose = s[:, :NUM_POSE, :]
    pred_betas = s[:, NUM_POSE:, :]
    mano_in = jnp.concatenate([pred_pose[..., 0], pred_betas[..., 0]], axis=1)
    mano_out = mano_in @ raw["mano_w"] + raw["mano_b"]
    verts = mano_out[:, :VERT_NUM * 3].reshape(b, VERT_NUM, 3)
    joints = mano_out[:, VERT_NUM * 3:].reshape(b, JOIN_NUM, 3)
    verts_sub = jnp.einsum("sv,bvc->bsc", raw["down_mat"], verts)
    preds = jnp.concatenate([verts_sub, joints], axis=1)                 # (B,24,3)
    cam = preds @ raw["cam_fc1_w"] + raw["cam_fc1_b"]                    # (B,24,1)
    cam = jnp.transpose(cam, (0, 2, 1))                                  # (B,1,24)
    cam = cam @ raw["cam_fc2_w"] + raw["cam_fc2_b"]                      # (B,1,150)
    cam = cam @ raw["cam_fc3_w"] + raw["cam_fc3_b"]                      # (B,1,3)
    cam = cam[:, 0, :]
    return cam, joints, verts_sub, verts, pred_pose, pred_betas


# -------------------------------- main ---------------------------------------
if __name__ == "__main__":
    key = jax.random.PRNGKey(0)
    k_param, k_img = jax.random.split(key)
    raw = init_raw_params(k_param)
    pack1, pack2 = fold_params(raw)
    images = jax.random.normal(k_img, (B, C, H, W), jnp.float32)

    fwd = jax.jit(trans_recon_forward)
    outs = jax.block_until_ready(fwd(pack1, pack2, images))

    cam, joints, verts_sub, verts, pose, betas = outs
    assert cam.shape == (B, 3)
    assert joints.shape == (B, JOIN_NUM, 3)
    assert verts_sub.shape == (B, VERT_SUB_NUM, 3)
    assert verts.shape == (B, VERT_NUM, 3)
    assert pose.shape == (B, NUM_POSE, 1)
    assert betas.shape == (B, NUM_BETAS, 1)

    # numeric check of the host-side folds against the un-folded f32 reference
    refs = reference_forward(raw, images)
    names = ["cam", "joints", "verts_sub", "verts", "pose", "betas"]
    for name, a, r in zip(names, outs, refs):
        err = float(jnp.max(jnp.abs(a - r)))
        tol = 1e-3 + 2e-2 * float(jnp.max(jnp.abs(r)))   # bf16 weights tolerance
        assert err <= tol, f"{name}: err={err} tol={tol}"

    print("KERNEL_OK")
</pallas_src>

<mosaic_0001>
module attributes {stable_mosaic.version = 11 : i64} {
  func.func @_fused_kernel(%arg0: i32, %arg1: memref<2x768xf32, #tpu.memory_space<vmem>>, %arg2: memref<770x64xbf16, #tpu.memory_space<vmem>>, %arg3: memref<66x268xbf16, #tpu.memory_space<vmem>>, %arg4: memref<2x268xf32, #tpu.memory_space<vmem>>) attributes {dimension_semantics = [#tpu.dimension_semantics<arbitrary>], iteration_bounds = array<i64: 1>, scalar_prefetch = 0 : i64, scratch_operands = 0 : i64, tpu.core_type = #tpu.core_type<tc>, window_params = [{pipeline_mode = #tpu.pipeline_mode<synchronous>, transform_indices = @transform_0, window_bounds = array<i64: 2, 768>}, {pipeline_mode = #tpu.pipeline_mode<synchronous>, transform_indices = @transform_1, window_bounds = array<i64: 770, 64>}, {pipeline_mode = #tpu.pipeline_mode<synchronous>, transform_indices = @transform_2, window_bounds = array<i64: 66, 268>}, {pipeline_mode = #tpu.pipeline_mode<synchronous>, transform_indices = @transform_3, window_bounds = array<i64: 2, 268>}]} {
    %c0 = arith.constant 0 : index
    %c0_0 = arith.constant 0 : index
    %0 = vector.load %arg1[%c0, %c0_0] : memref<2x768xf32, #tpu.memory_space<vmem>>, vector<2x768xf32>
    %1 = arith.truncf %0 : vector<2x768xf32> to vector<2x768xbf16>
    %c0_1 = arith.constant 0 : index
    %c0_2 = arith.constant 0 : index
    %2 = vector.load %arg2[%c0_1, %c0_2] : memref<770x64xbf16, #tpu.memory_space<vmem>>, vector<768x64xbf16>
    %c768 = arith.constant 768 : index
    %c0_3 = arith.constant 0 : index
    %3 = vector.load %arg2[%c768, %c0_3] : memref<770x64xbf16, #tpu.memory_space<vmem>>, vector<1x64xbf16>
    %4 = arith.extf %3 : vector<1x64xbf16> to vector<1x64xf32>
    %cst = arith.constant dense<0.000000e+00> : vector<2x64xf32>
    %5 = tpu.matmul %1, %2, %cst {dimension_numbers = #tpu.dot_dimension_numbers<[1], [0], [0], [1], [0, 0, 1, 1], [], []>} : vector<2x768xbf16>, vector<768x64xbf16>, vector<2x64xf32> -> vector<2x64xf32>
    %6 = vector.broadcast %4 : vector<1x64xf32> to vector<2x64xf32>
    %7 = arith.addf %5, %6 : vector<2x64xf32>
    %cst_4 = arith.constant 0.000000e+00 : f32
    %8 = vector.broadcast %cst_4 : f32 to vector<2x64xf32>
    %9 = arith.maximumf %7, %8 : vector<2x64xf32>
    %c0_5 = arith.constant 0 : index
    %c0_6 = arith.constant 0 : index
    %10 = vector.load %arg3[%c0_5, %c0_6] : memref<66x268xbf16, #tpu.memory_space<vmem>>, vector<64x268xbf16>
    %c64 = arith.constant 64 : index
    %c0_7 = arith.constant 0 : index
    %11 = vector.load %arg3[%c64, %c0_7] : memref<66x268xbf16, #tpu.memory_space<vmem>>, vector<1x268xbf16>
    %12 = arith.extf %11 : vector<1x268xbf16> to vector<1x268xf32>
    %13 = arith.truncf %9 : vector<2x64xf32> to vector<2x64xbf16>
    %cst_8 = arith.constant dense<0.000000e+00> : vector<2x268xf32>
    %14 = tpu.matmul %13, %10, %cst_8 {dimension_numbers = #tpu.dot_dimension_numbers<[1], [0], [0], [1], [0, 0, 1, 1], [], []>} : vector<2x64xbf16>, vector<64x268xbf16>, vector<2x268xf32> -> vector<2x268xf32>
    %15 = vector.broadcast %12 : vector<1x268xf32> to vector<2x268xf32>
    %16 = arith.addf %14, %15 : vector<2x268xf32>
    %c0_9 = arith.constant 0 : index
    %c0_10 = arith.constant 0 : index
    %17 = vector.load %arg4[%c0_9, %c0_10] : memref<2x268xf32, #tpu.memory_space<vmem>>, vector<2x268xf32>
    tpu.vector_store %arg4[%c0_9, %c0_10], %16 {strides = array<i32>} : memref<2x268xf32, #tpu.memory_space<vmem>>, vector<2x268xf32>,
    return
  }
  func.func @transform_0(%arg0: i32) -> (i32, i32) {
    %c0_i32 = arith.constant 0 : i32
    %c0_i32_0 = arith.constant 0 : i32
    %c0_i32_1 = arith.constant 0 : i32
    return %c0_i32, %c0_i32_0 : i32, i32
  }
  func.func @transform_1(%arg0: i32) -> (i32, i32) {
    %c0_i32 = arith.constant 0 : i32
    %c0_i32_0 = arith.constant 0 : i32
    %c0_i32_1 = arith.constant 0 : i32
    return %c0_i32, %c0_i32_0 : i32, i32
  }
  func.func @transform_2(%arg0: i32) -> (i32, i32) {
    %c0_i32 = arith.constant 0 : i32
    %c0_i32_0 = arith.constant 0 : i32
    %c0_i32_1 = arith.constant 0 : i32
    return %c0_i32, %c0_i32_0 : i32, i32
  }
  func.func @transform_3(%arg0: i32) -> (i32, i32) {
    %c0_i32 = arith.constant 0 : i32
    %c0_i32_0 = arith.constant 0 : i32
    %c0_i32_1 = arith.constant 0 : i32
    return %c0_i32, %c0_i32_0 : i32, i32
  }
}

</mosaic_0001>

<llo_original>
// kernel: trans_recon_forward.1
$region0: #{trans_recon_forward.1}
  #allocation0 [shape = 'u32[]', space=smem, size = 0x4, offset = 0x4, fixed_abs, tag = 'smem constant byte address 0x4 - core index']
  #allocation1 [shape = 'u32[144,128]{1,0:T(1,128)}', space=vmem, size = 0x12000, scoped, tag = 'internal scratch']
  %s0 = inlined_call_operand.vmem [shape: f32[2,768], index: 0, kind: input, shape index: {}]
  %s1 = inlined_call_operand.vmem [shape: bf16[770,64], index: 1, kind: input, shape index: {}]
  %s2 = inlined_call_operand.vmem [shape: bf16[66,268], index: 2, kind: input, shape index: {}]
  %s3 = inlined_call_operand.vmem [shape: f32[2,268], index: 3, kind: output, shape index: {}]
  %s4 = sld [smem:[#allocation0]]
  $region22: #{trans_recon_forward.1} parent=0
    _
  %s6 = ssub.s32 1, %s4
  %s7 = scalar_select 0, %s6, %s4
  // Predicated region
  $region2: #{trans_recon_forward.1} parent=0 // pred_check
    _
  $region3: #{trans_recon_forward.1} parent=0 // pred_check_branch
    %9 = sbr.rel (0) target = $region5
  $region4: #{trans_recon_forward.1} parent=0 // pred_region
    _
  $region5: #{trans_recon_forward.1} parent=0 // pred_fallthru
    _
  // Predicated region
  $region6: #{trans_recon_forward.1} parent=0 // pred_check
    _
  $region7: #{trans_recon_forward.1} parent=0 // pred_check_branch
    %11 = sbr.rel (0) target = $region9
  $region8: #{trans_recon_forward.1} parent=0 // pred_region
    _
  $region9: #{trans_recon_forward.1} parent=0 // pred_fallthru
    _
  // Predicated region
  $region10: #{trans_recon_forward.1} parent=0 // pred_check
    _
  $region11: #{trans_recon_forward.1} parent=0 // pred_check_branch
    %13 = sbr.rel (0) target = $region13
  $region12: #{trans_recon_forward.1} parent=0 // pred_region
    _
  $region13: #{trans_recon_forward.1} parent=0 // pred_fallthru
    _
  %v15 = vld [vmem:[%s0] sm:$0xff]
  %v16 = vld [vmem:[%s0 + $0x8] sm:$0xf]
  %v19 = vcombine.high %v15, %v15
  %v21 = vunpack.c.l.s4 1983009808
  %v22 = vunpack.c.0.s8 %v21
  %v23 = vlaneseq
  %v24 = vshrl.u32 %v23, 7
  %v25 = vsub.s32 %v22, %v24
  %v26 = vrot.slane %v15, %v25
  %v28 = vunpack.c.l.s4 1983009808
  %v29 = vunpack.c.0.s8 %v28
  %v30 = vlaneseq
  %v31 = vshrl.u32 %v30, 7
  %v32 = vsub.s32 %v29, %v31
  %v33 = vrot.slane %v19, %v32
  %v34 = vcombine.high %v26, %v26
  %v35 = vcombine.high %v33, %v33
  %v37 = vunpack.c.l.s4 1983009808
  %v38 = vunpack.c.0.s8 %v37
  %v39 = vlaneseq
  %v40 = vshrl.u32 %v39, 7
  %v41 = vsub.s32 %v38, %v40
  %v42 = vrot.slane %v16, %v41
  %v43 = vcombine.high %v42, %v42
  %v50 = vpack.c.bf16 %v26, %v26
  %v51 = vpack.c.bf16 %v34, %v34
  %v52 = vpack.c.bf16 %v33, %v33
  %v53 = vpack.c.bf16 %v35, %v35
  %v54 = vpack.c.bf16 %v42, %v42
  %v55 = vpack.c.bf16 %v43, %v43
  %v56 = vld [vmem:[%s1] sm:$0xf]
  %v57 = vld [vmem:[%s1 + $0x4] sm:$0xf]
  %v58 = vld [vmem:[%s1 + $0x8] sm:$0xf]
  %v59 = vld [vmem:[%s1 + $0xc] sm:$0xf]
  %v60 = vld [vmem:[%s1 + $0x10] sm:$0xf]
  %v61 = vld [vmem:[%s1 + $0x14] sm:$0xf]
  %v62 = vld [vmem:[%s1 + $0x18] sm:$0xf]
  %v63 = vld [vmem:[%s1 + $0x1c] sm:$0xf]
  %v64 = vld [vmem:[%s1 + $0x20] sm:$0xf]
  %v65 = vld [vmem:[%s1 + $0x24] sm:$0xf]
  %v66 = vld [vmem:[%s1 + $0x28] sm:$0xf]
  %v67 = vld [vmem:[%s1 + $0x2c] sm:$0xf]
  %v68 = vld [vmem:[%s1 + $0x30] sm:$0xf]
  %v69 = vld [vmem:[%s1 + $0x34] sm:$0xf]
  %v70 = vld [vmem:[%s1 + $0x38] sm:$0xf]
  %v71 = vld [vmem:[%s1 + $0x3c] sm:$0xf]
  %v72 = vld [vmem:[%s1 + $0x40] sm:$0xf]
  %v73 = vld [vmem:[%s1 + $0x44] sm:$0xf]
  %v74 = vld [vmem:[%s1 + $0x48] sm:$0xf]
  %v75 = vld [vmem:[%s1 + $0x4c] sm:$0xf]
  %v76 = vld [vmem:[%s1 + $0x50] sm:$0xf]
  %v77 = vld [vmem:[%s1 + $0x54] sm:$0xf]
  %v78 = vld [vmem:[%s1 + $0x58] sm:$0xf]
  %v79 = vld [vmem:[%s1 + $0x5c] sm:$0xf]
  %v80 = vld [vmem:[%s1 + $0x60] sm:$0xf]
  %v81 = vld [vmem:[%s1 + $0x64] sm:$0xf]
  %v82 = vld [vmem:[%s1 + $0x68] sm:$0xf]
  %v83 = vld [vmem:[%s1 + $0x6c] sm:$0xf]
  %v84 = vld [vmem:[%s1 + $0x70] sm:$0xf]
  %v85 = vld [vmem:[%s1 + $0x74] sm:$0xf]
  %v86 = vld [vmem:[%s1 + $0x78] sm:$0xf]
  %v87 = vld [vmem:[%s1 + $0x7c] sm:$0xf]
  %v88 = vld [vmem:[%s1 + $0x80] sm:$0xf]
  %v89 = vld [vmem:[%s1 + $0x84] sm:$0xf]
  %v90 = vld [vmem:[%s1 + $0x88] sm:$0xf]
  %v91 = vld [vmem:[%s1 + $0x8c] sm:$0xf]
  %v92 = vld [vmem:[%s1 + $0x90] sm:$0xf]
  %v93 = vld [vmem:[%s1 + $0x94] sm:$0xf]
  %v94 = vld [vmem:[%s1 + $0x98] sm:$0xf]
  %v95 = vld [vmem:[%s1 + $0x9c] sm:$0xf]
  %v96 = vld [vmem:[%s1 + $0xa0] sm:$0xf]
  %v97 = vld [vmem:[%s1 + $0xa4] sm:$0xf]
  %v98 = vld [vmem:[%s1 + $0xa8] sm:$0xf]
  %v99 = vld [vmem:[%s1 + $0xac] sm:$0xf]
  %v100 = vld [vmem:[%s1 + $0xb0] sm:$0xf]
  %v101 = vld [vmem:[%s1 + $0xb4] sm:$0xf]
  %v102 = vld [vmem:[%s1 + $0xb8] sm:$0xf]
  %v103 = vld [vmem:[%s1 + $0xbc] sm:$0xf]
  %v104 = vld [vmem:[%s1 + $0xc0] sm:$0xf]
  %v105 = vld [vmem:[%s1 + $0xc4] sm:$0xf]
  %v106 = vld [vmem:[%s1 + $0xc8] sm:$0xf]
  %v107 = vld [vmem:[%s1 + $0xcc] sm:$0xf]
  %v108 = vld [vmem:[%s1 + $0xd0] sm:$0xf]
  %v109 = vld [vmem:[%s1 + $0xd4] sm:$0xf]
  %v110 = vld [vmem:[%s1 + $0xd8] sm:$0xf]
  %v111 = vld [vmem:[%s1 + $0xdc] sm:$0xf]
  %v112 = vld [vmem:[%s1 + $0xe0] sm:$0xf]
  %v113 = vld [vmem:[%s1 + $0xe4] sm:$0xf]
  %v114 = vld [vmem:[%s1 + $0xe8] sm:$0xf]
  %v115 = vld [vmem:[%s1 + $0xec] sm:$0xf]
  %v116 = vld [vmem:[%s1 + $0xf0] sm:$0xf]
  %v117 = vld [vmem:[%s1 + $0xf4] sm:$0xf]
  %v118 = vld [vmem:[%s1 + $0xf8] sm:$0xf]
  %v119 = vld [vmem:[%s1 + $0xfc] sm:$0xf]
  %v120 = vld [vmem:[%s1 + $0x100] sm:$0xf]
  %v121 = vld [vmem:[%s1 + $0x104] sm:$0xf]
  %v122 = vld [vmem:[%s1 + $0x108] sm:$0xf]
  %v123 = vld [vmem:[%s1 + $0x10c] sm:$0xf]
  %v124 = vld [vmem:[%s1 + $0x110] sm:$0xf]
  %v125 = vld [vmem:[%s1 + $0x114] sm:$0xf]
  %v126 = vld [vmem:[%s1 + $0x118] sm:$0xf]
  %v127 = vld [vmem:[%s1 + $0x11c] sm:$0xf]
  %v128 = vld [vmem:[%s1 + $0x120] sm:$0xf]
  %v129 = vld [vmem:[%s1 + $0x124] sm:$0xf]
  %v130 = vld [vmem:[%s1 + $0x128] sm:$0xf]
  %v131 = vld [vmem:[%s1 + $0x12c] sm:$0xf]
  %v132 = vld [vmem:[%s1 + $0x130] sm:$0xf]
  %v133 = vld [vmem:[%s1 + $0x134] sm:$0xf]
  %v134 = vld [vmem:[%s1 + $0x138] sm:$0xf]
  %v135 = vld [vmem:[%s1 + $0x13c] sm:$0xf]
  %v136 = vld [vmem:[%s1 + $0x140] sm:$0xf]
  %v137 = vld [vmem:[%s1 + $0x144] sm:$0xf]
  %v138 = vld [vmem:[%s1 + $0x148] sm:$0xf]
  %v139 = vld [vmem:[%s1 + $0x14c] sm:$0xf]
  %v140 = vld [vmem:[%s1 + $0x150] sm:$0xf]
  %v141 = vld [vmem:[%s1 + $0x154] sm:$0xf]
  %v142 = vld [vmem:[%s1 + $0x158] sm:$0xf]
  %v143 = vld [vmem:[%s1 + $0x15c] sm:$0xf]
  %v144 = vld [vmem:[%s1 + $0x160] sm:$0xf]
  %v145 = vld [vmem:[%s1 + $0x164] sm:$0xf]
  %v146 = vld [vmem:[%s1 + $0x168] sm:$0xf]
  %v147 = vld [vmem:[%s1 + $0x16c] sm:$0xf]
  %v148 = vld [vmem:[%s1 + $0x170] sm:$0xf]
  %v149 = vld [vmem:[%s1 + $0x174] sm:$0xf]
  %v150 = vld [vmem:[%s1 + $0x178] sm:$0xf]
  %v151 = vld [vmem:[%s1 + $0x17c] sm:$0xf]
  %v152 = vld [vmem:[%s1 + $0x180] sm:$0x1]
  %v153 = vunpack.c.l.bf16 %v152
  %v154 = vlaneseq
  %v155 = vshrl.u32 %v154, 7
  %v156 = vsub.s32 0, %v155
  %v157 = vrot.slane %v153, %v156
  %v254 = vunpack.c.l.b16 %v56
  %v255 = vunpack.c.l.b16 %v57
  %v256 = vunpack.c.l.b16 %v58
  %v257 = vunpack.c.l.b16 %v59
  %v258 = vunpack.c.l.b16 %v60
  %v259 = vunpack.c.l.b16 %v61
  %v260 = vunpack.c.l.b16 %v62
  %v261 = vunpack.c.l.b16 %v63
  %v262 = vunpack.c.l.b16 %v64
  %v263 = vunpack.c.l.b16 %v65
  %v264 = vunpack.c.l.b16 %v66
  %v265 = vunpack.c.l.b16 %v67
  %v266 = vunpack.c.l.b16 %v68
  %v267 = vunpack.c.l.b16 %v69
  %v268 = vunpack.c.l.b16 %v70
  %v269 = vunpack.c.l.b16 %v71
  %v270 = vunpack.c.l.b16 %v72
  %v271 = vunpack.c.l.b16 %v73
  %v272 = vunpack.c.l.b16 %v74
  %v273 = vunpack.c.l.b16 %v75
  %v274 = vunpack.c.l.b16 %v76
  %v275 = vunpack.c.l.b16 %v77
  %v276 = vunpack.c.l.b16 %v78
  %v277 = vunpack.c.l.b16 %v79
  %v278 = vunpack.c.l.b16 %v80
  %v279 = vunpack.c.l.b16 %v81
  %v280 = vunpack.c.l.b16 %v82
  %v281 = vunpack.c.l.b16 %v83
  %v282 = vunpack.c.l.b16 %v84
  %v283 = vunpack.c.l.b16 %v85
  %v284 = vunpack.c.l.b16 %v86
  %v285 = vunpack.c.l.b16 %v87
  %v286 = vunpack.c.l.b16 %v88
  %v287 = vunpack.c.l.b16 %v89
  %v288 = vunpack.c.l.b16 %v90
  %v289 = vunpack.c.l.b16 %v91
  %v290 = vunpack.c.l.b16 %v92
  %v291 = vunpack.c.l.b16 %v93
  %v292 = vunpack.c.l.b16 %v94
  %v293 = vunpack.c.l.b16 %v95
  %v294 = vunpack.c.l.b16 %v96
  %v295 = vunpack.c.l.b16 %v97
  %v296 = vunpack.c.l.b16 %v98
  %v297 = vunpack.c.l.b16 %v99
  %v298 = vunpack.c.l.b16 %v100
  %v299 = vunpack.c.l.b16 %v101
  %v300 = vunpack.c.l.b16 %v102
  %v301 = vunpack.c.l.b16 %v103
  %v302 = vunpack.c.l.b16 %v104
  %v303 = vunpack.c.l.b16 %v105
  %v304 = vunpack.c.l.b16 %v106
  %v305 = vunpack.c.l.b16 %v107
  %v306 = vunpack.c.l.b16 %v108
  %v307 = vunpack.c.l.b16 %v109
  %v308 = vunpack.c.l.b16 %v110
  %v309 = vunpack.c.l.b16 %v111
  %v310 = vunpack.c.l.b16 %v112
  %v311 = vunpack.c.l.b16 %v113
  %v312 = vunpack.c.l.b16 %v114
  %v313 = vunpack.c.l.b16 %v115
  %v314 = vunpack.c.l.b16 %v116
  %v315 = vunpack.c.l.b16 %v117
  %v316 = vunpack.c.l.b16 %v118
  %v317 = vunpack.c.l.b16 %v119
  %v318 = vunpack.c.l.b16 %v120
  %v319 = vunpack.c.l.b16 %v121
  %v320 = vunpack.c.l.b16 %v122
  %v321 = vunpack.c.l.b16 %v123
  %v322 = vunpack.c.l.b16 %v124
  %v323 = vunpack.c.l.b16 %v125
  %v324 = vunpack.c.l.b16 %v126
  %v325 = vunpack.c.l.b16 %v127
  %v326 = vunpack.c.l.b16 %v128
  %v327 = vunpack.c.l.b16 %v129
  %v328 = vunpack.c.l.b16 %v130
  %v329 = vunpack.c.l.b16 %v131
  %v330 = vunpack.c.l.b16 %v132
  %v331 = vunpack.c.l.b16 %v133
  %v332 = vunpack.c.l.b16 %v134
  %v333 = vunpack.c.l.b16 %v135
  %v334 = vunpack.c.l.b16 %v136
  %v335 = vunpack.c.l.b16 %v137
  %v336 = vunpack.c.l.b16 %v138
  %v337 = vunpack.c.l.b16 %v139
  %v338 = vunpack.c.l.b16 %v140
  %v339 = vunpack.c.l.b16 %v141
  %v340 = vunpack.c.l.b16 %v142
  %v341 = vunpack.c.l.b16 %v143
  %v342 = vunpack.c.l.b16 %v144
  %v343 = vunpack.c.l.b16 %v145
  %v344 = vunpack.c.l.b16 %v146
  %v345 = vunpack.c.l.b16 %v147
  %v346 = vunpack.c.l.b16 %v148
  %v347 = vunpack.c.l.b16 %v149
  %v348 = vunpack.c.l.b16 %v150
  %v349 = vunpack.c.l.b16 %v151
  %v350 = vpack.c.b16 %v255, %v254
  %v351 = vpack.c.b16 %v257, %v256
  %v352 = vpack.c.b16 %v259, %v258
  %v353 = vpack.c.b16 %v261, %v260
  %v354 = vpack.c.b16 %v263, %v262
  %v355 = vpack.c.b16 %v265, %v264
  %v356 = vpack.c.b16 %v267, %v266
  %v357 = vpack.c.b16 %v269, %v268
  %v358 = vpack.c.b16 %v271, %v270
  %v359 = vpack.c.b16 %v273, %v272
  %v360 = vpack.c.b16 %v275, %v274
  %v361 = vpack.c.b16 %v277, %v276
  %v362 = vpack.c.b16 %v279, %v278
  %v363 = vpack.c.b16 %v281, %v280
  %v364 = vpack.c.b16 %v283, %v282
  %v365 = vpack.c.b16 %v285, %v284
  %v366 = vpack.c.b16 %v287, %v286
  %v367 = vpack.c.b16 %v289, %v288
  %v368 = vpack.c.b16 %v291, %v290
  %v369 = vpack.c.b16 %v293, %v292
  %v370 = vpack.c.b16 %v295, %v294
  %v371 = vpack.c.b16 %v297, %v296
  %v372 = vpack.c.b16 %v299, %v298
  %v373 = vpack.c.b16 %v301, %v300
  %v374 = vpack.c.b16 %v303, %v302
  %v375 = vpack.c.b16 %v305, %v304
  %v376 = vpack.c.b16 %v307, %v306
  %v377 = vpack.c.b16 %v309, %v308
  %v378 = vpack.c.b16 %v311, %v310
  %v379 = vpack.c.b16 %v313, %v312
  %v380 = vpack.c.b16 %v315, %v314
  %v381 = vpack.c.b16 %v317, %v316
  %v382 = vpack.c.b16 %v319, %v318
  %v383 = vpack.c.b16 %v321, %v320
  %v384 = vpack.c.b16 %v323, %v322
  %v385 = vpack.c.b16 %v325, %v324
  %v386 = vpack.c.b16 %v327, %v326
  %v387 = vpack.c.b16 %v329, %v328
  %v388 = vpack.c.b16 %v331, %v330
  %v389 = vpack.c.b16 %v333, %v332
  %v390 = vpack.c.b16 %v335, %v334
  %v391 = vpack.c.b16 %v337, %v336
  %v392 = vpack.c.b16 %v339, %v338
  %v393 = vpack.c.b16 %v341, %v340
  %v394 = vpack.c.b16 %v343, %v342
  %v395 = vpack.c.b16 %v345, %v344
  %v396 = vpack.c.b16 %v347, %v346
  %v397 = vpack.c.b16 %v349, %v348
  %446 = vmatprep.subr.bf16.mxu0 0
  %447 = vmatpush1.bf16.msra.mxu0 %v350
  %448 = vmatprep.subr.bf16.mxu0 0
  %449 = vmatpush1.bf16.msra.mxu0 %v351
  %450 = vmatprep.subr.bf16.mxu0 0
  %451 = vmatpush1.bf16.msra.mxu0 %v352
  %452 = vmatprep.subr.bf16.mxu0 0
  %453 = vmatpush1.bf16.msra.mxu0 %v353
  %454 = vmatprep.subr.bf16.mxu0 0
  %455 = vmatpush1.bf16.msra.mxu0 %v354
  %456 = vmatprep.subr.bf16.mxu0 0
  %457 = vmatpush1.bf16.msra.mxu0 %v355
  %458 = vmatprep.subr.bf16.mxu0 0
  %459 = vmatpush1.bf16.msra.mxu0 %v356
  %460 = vmatprep.subr.bf16.mxu0 0
  %461 = vmatpush1.bf16.msra.mxu0 %v357
  %462 = vmatprep.subr.bf16.mxu0 0
  %463 = vmatpush1.bf16.msra.mxu0 %v358
  %464 = vmatprep.subr.bf16.mxu0 0
  %465 = vmatpush1.bf16.msra.mxu0 %v359
  %466 = vmatprep.subr.bf16.mxu0 0
  %467 = vmatpush1.bf16.msra.mxu0 %v360
  %468 = vmatprep.subr.bf16.mxu0 0
  %469 = vmatpush1.bf16.msra.mxu0 %v361
  %470 = vmatprep.subr.bf16.mxu0 0
  %471 = vmatpush1.bf16.msra.mxu0 %v362
  %472 = vmatprep.subr.bf16.mxu0 0
  %473 = vmatpush1.bf16.msra.mxu0 %v363
  %474 = vmatprep.subr.bf16.mxu0 0
  %475 = vmatpush1.bf16.msra.mxu0 %v364
  %476 = vmatprep.subr.bf16.mxu0 0
  %477 = vmatpush1.bf16.msra.mxu0 %v365
  %478 = vmatprep.mubr.bf16.mxu0 %v51
  %479 = vmatmul.mubr.bf16.gmra.mrb[0].mxu0 %v50
  %v480 = vpop.f32.mrb[0].mxu0
  %v481 = vadd.f32 %v157, %v480
  %v482 = vpop.f32.mrb[0].mxu0
  %v483 = vpop.f32.mrb[0].mxu0
  %v484 = vpop.f32.mrb[0].mxu0
  %485 = vdwg.mxu0
  %486 = vmatprep.subr.bf16.mxu0 0
  %487 = vmatpush1.bf16.msra.mxu0 %v366
  %488 = vmatprep.subr.bf16.mxu0 0
  %489 = vmatpush1.bf16.msra.mxu0 %v367
  %490 = vmatprep.subr.bf16.mxu0 0
  %491 = vmatpush1.bf16.msra.mxu0 %v368
  %492 = vmatprep.subr.bf16.mxu0 0
  %493 = vmatpush1.bf16.msra.mxu0 %v369
  %494 = vmatprep.subr.bf16.mxu0 0
  %495 = vmatpush1.bf16.msra.mxu0 %v370
  %496 = vmatprep.subr.bf16.mxu0 0
  %497 = vmatpush1.bf16.msra.mxu0 %v371
  %498 = vmatprep.subr.bf16.mxu0 0
  %499 = vmatpush1.bf16.msra.mxu0 %v372
  %500 = vmatprep.subr.bf16.mxu0 0
  %501 = vmatpush1.bf16.msra.mxu0 %v373
  %502 = vmatprep.subr.bf16.mxu0 0
  %503 = vmatpush1.bf16.msra.mxu0 %v374
  %504 = vmatprep.subr.bf16.mxu0 0
  %505 = vmatpush1.bf16.msra.mxu0 %v375
  %506 = vmatprep.subr.bf16.mxu0 0
  %507 = vmatpush1.bf16.msra.mxu0 %v376
  %508 = vmatprep.subr.bf16.mxu0 0
  %509 = vmatpush1.bf16.msra.mxu0 %v377
  %510 = vmatprep.subr.bf16.mxu0 0
  %511 = vmatpush1.bf16.msra.mxu0 %v378
  %512 = vmatprep.subr.bf16.mxu0 0
  %513 = vmatpush1.bf16.msra.mxu0 %v379
  %514 = vmatprep.subr.bf16.mxu0 0
  %515 = vmatpush1.bf16.msra.mxu0 %v380
  %516 = vmatprep.subr.bf16.mxu0 0
  %517 = vmatpush1.bf16.msra.mxu0 %v381
  %518 = vmatprep.mubr.bf16.mxu0 %v53
  %519 = vmatmul.mubr.bf16.gmra.mrb[0].mxu0 %v52
  %v520 = vpop.f32.mrb[0].mxu0
  %v521 = vadd.f32 %v481, %v520
  %v522 = vpop.f32.mrb[0].mxu0
  %v523 = vpop.f32.mrb[0].mxu0
  %v524 = vpop.f32.mrb[0].mxu0
  %525 = vdwg.mxu0
  %526 = vmatprep.subr.bf16.mxu0 0
  %527 = vmatpush1.bf16.msra.mxu0 %v382
  %528 = vmatprep.subr.bf16.mxu0 0
  %529 = vmatpush1.bf16.msra.mxu0 %v383
  %530 = vmatprep.subr.bf16.mxu0 0
  %531 = vmatpush1.bf16.msra.mxu0 %v384
  %532 = vmatprep.subr.bf16.mxu0 0
  %533 = vmatpush1.bf16.msra.mxu0 %v385
  %534 = vmatprep.subr.bf16.mxu0 0
  %535 = vmatpush1.bf16.msra.mxu0 %v386
  %536 = vmatprep.subr.bf16.mxu0 0
  %537 = vmatpush1.bf16.msra.mxu0 %v387
  %538 = vmatprep.subr.bf16.mxu0 0
  %539 = vmatpush1.bf16.msra.mxu0 %v388
  %540 = vmatprep.subr.bf16.mxu0 0
  %541 = vmatpush1.bf16.msra.mxu0 %v389
  %542 = vmatprep.subr.bf16.mxu0 0
  %543 = vmatpush1.bf16.msra.mxu0 %v390
  %544 = vmatprep.subr.bf16.mxu0 0
  %545 = vmatpush1.bf16.msra.mxu0 %v391
  %546 = vmatprep.subr.bf16.mxu0 0
  %547 = vmatpush1.bf16.msra.mxu0 %v392
  %548 = vmatprep.subr.bf16.mxu0 0
  %549 = vmatpush1.bf16.msra.mxu0 %v393
  %550 = vmatprep.subr.bf16.mxu0 0
  %551 = vmatpush1.bf16.msra.mxu0 %v394
  %552 = vmatprep.subr.bf16.mxu0 0
  %553 = vmatpush1.bf16.msra.mxu0 %v395
  %554 = vmatprep.subr.bf16.mxu0 0
  %555 = vmatpush1.bf16.msra.mxu0 %v396
  %556 = vmatprep.subr.bf16.mxu0 0
  %557 = vmatpush1.bf16.msra.mxu0 %v397
  %558 = vmatprep.mubr.bf16.mxu0 %v55
  %559 = vmatmul.mubr.bf16.gmra.mrb[0].mxu0 %v54
  %v560 = vpop.f32.mrb[0].mxu0
  %v561 = vadd.f32 %v521, %v560
  %v562 = vpop.f32.mrb[0].mxu0
  %v563 = vpop.f32.mrb[0].mxu0
  %v564 = vpop.f32.mrb[0].mxu0
  %565 = vdwg.mxu0
  %v566 = vmax.f32 %v561, 0.0
  %v567 = vld [vmem:[%s2] sm:$0xff]
  %v568 = vld [vmem:[%s2 + $0x8] sm:$0xf]
  %v569 = vld [vmem:[%s2 + $0xc] sm:$0xff]
  %v570 = vld [vmem:[%s2 + $0x14] sm:$0xf]
  %v571 = vld [vmem:[%s2 + $0x18] sm:$0xff]
  %v572 = vld [vmem:[%s2 + $0x20] sm:$0xf]
  %v573 = vld [vmem:[%s2 + $0x24] sm:$0xff]
  %v574 = vld [vmem:[%s2 + $0x2c] sm:$0xf]
  %v575 = vld [vmem:[%s2 + $0x30] sm:$0xff]
  %v576 = vld [vmem:[%s2 + $0x38] sm:$0xf]
  %v577 = vld [vmem:[%s2 + $0x3c] sm:$0xff]
  %v578 = vld [vmem:[%s2 + $0x44] sm:$0xf]
  %v579 = vld [vmem:[%s2 + $0x48] sm:$0xff]
  %v580 = vld [vmem:[%s2 + $0x50] sm:$0xf]
  %v581 = vld [vmem:[%s2 + $0x54] sm:$0xff]
  %v582 = vld [vmem:[%s2 + $0x5c] sm:$0xf]
  %v583 = vld [vmem:[%s2 + $0x60] sm:$0x11]
  %v584 = vld [vmem:[%s2 + $0x68] sm:$0x1]
  %v585 = vunpack.c.l.bf16 %v583
  %v586 = vunpack.c.h.bf16 %v583
  %v587 = vunpack.c.l.bf16 %v584
  %v588 = vpack.c.bf16 %v566, %v566
  %v589 = vlaneseq
  %v590 = vshrl.u32 %v589, 7
  %v591 = vsub.s32 0, %v590
  %v592 = vrot.slane %v585, %v591
  %v593 = vlaneseq
  %v594 = vshrl.u32 %v593, 7
  %v595 = vsub.s32 0, %v594
  %v596 = vrot.slane %v586, %v595
  %v597 = vlaneseq
  %v598 = vshrl.u32 %v597, 7
  %v599 = vsub.s32 0, %v598
  %v600 = vrot.slane %v587, %v599
  %v617 = vunpack.c.l.b16 %v567
  %v618 = vunpack.c.h.b16 %v567
  %v619 = vunpack.c.l.b16 %v568
  %v620 = vunpack.c.l.b16 %v569
  %v621 = vunpack.c.h.b16 %v569
  %v622 = vunpack.c.l.b16 %v570
  %v623 = vunpack.c.l.b16 %v571
  %v624 = vunpack.c.h.b16 %v571
  %v625 = vunpack.c.l.b16 %v572
  %v626 = vunpack.c.l.b16 %v573
  %v627 = vunpack.c.h.b16 %v573
  %v628 = vunpack.c.l.b16 %v574
  %v629 = vunpack.c.l.b16 %v575
  %v630 = vunpack.c.h.b16 %v575
  %v631 = vunpack.c.l.b16 %v576
  %v632 = vunpack.c.l.b16 %v577
  %v633 = vunpack.c.h.b16 %v577
  %v634 = vunpack.c.l.b16 %v578
  %v635 = vunpack.c.l.b16 %v579
  %v636 = vunpack.c.h.b16 %v579
  %v637 = vunpack.c.l.b16 %v580
  %v638 = vunpack.c.l.b16 %v581
  %v639 = vunpack.c.h.b16 %v581
  %v640 = vunpack.c.l.b16 %v582
  %v641 = vpack.c.b16 %v620, %v617
  %v642 = vpack.c.b16 %v621, %v618
  %v643 = vpack.c.b16 %v622, %v619
  %v644 = vpack.c.b16 %v626, %v623
  %v645 = vpack.c.b16 %v627, %v624
  %v646 = vpack.c.b16 %v628, %v625
  %v647 = vpack.c.b16 %v632, %v629
  %v648 = vpack.c.b16 %v633, %v630
  %v649 = vpack.c.b16 %v634, %v631
  %v650 = vpack.c.b16 %v638, %v635
  %v651 = vpack.c.b16 %v639, %v636
  %v652 = vpack.c.b16 %v640, %v637
  %vm665 = vcmask 523264
  %v667 = vsel %vm665, %v588, 0
  %669 = vmatprep.subr.bf16.mxu0 %v642
  %670 = vmatpush1.bf16.msra.mxu0 %v641
  %671 = vmatprep.subr.bf16.mxu0 %v645
  %672 = vmatpush1.bf16.msra.mxu0 %v644
  %673 = vmatprep.subr.bf16.mxu0 %v648
  %674 = vmatpush1.bf16.msra.mxu0 %v647
  %675 = vmatprep.subr.bf16.mxu0 %v651
  %676 = vmatpush1.bf16.msra.mxu0 %v650
  %677 = vmatprep.subr.bf16.mxu0 0
  %678 = vmatpush1.bf16.msra.mxu0 0
  %679 = vmatprep.subr.bf16.mxu0 0
  %680 = vmatpush1.bf16.msra.mxu0 0
  %681 = vmatprep.subr.bf16.mxu0 0
  %682 = vmatpush1.bf16.msra.mxu0 0
  %683 = vmatprep.subr.bf16.mxu0 0
  %684 = vmatpush1.bf16.msra.mxu0 0
  %685 = vmatprep.subr.bf16.mxu0 0
  %686 = vmatpush1.bf16.msra.mxu0 0
  %687 = vmatprep.subr.bf16.mxu0 0
  %688 = vmatpush1.bf16.msra.mxu0 0
  %689 = vmatprep.subr.bf16.mxu0 0
  %690 = vmatpush1.bf16.msra.mxu0 0
  %691 = vmatprep.subr.bf16.mxu0 0
  %692 = vmatpush1.bf16.msra.mxu0 0
  %693 = vmatprep.subr.bf16.mxu0 0
  %694 = vmatpush1.bf16.msra.mxu0 0
  %695 = vmatprep.subr.bf16.mxu0 0
  %696 = vmatpush1.bf16.msra.mxu0 0
  %697 = vmatprep.subr.bf16.mxu0 0
  %698 = vmatpush1.bf16.msra.mxu0 0
  %699 = vmatprep.subr.bf16.mxu0 0
  %700 = vmatpush1.bf16.msra.mxu0 0
  %701 = vmatprep.mubr.bf16.mxu0 0
  %702 = vmatmul.mubr.bf16.gmra.mrb[0].mxu0 %v667
  %v703 = vpop.f32.mrb[0].mxu0
  %v704 = vadd.f32 %v592, %v703
  %v705 = vpop.f32.mrb[0].mxu0
  %v706 = vadd.f32 %v596, %v705
  %v707 = vpop.f32.mrb[0].mxu0
  %v708 = vpop.f32.mrb[0].mxu0
  %709 = vdwg.mxu0
  %710 = vmatprep.subr.bf16.mxu0 0
  %711 = vmatpush1.bf16.msra.mxu0 %v643
  %712 = vmatprep.subr.bf16.mxu0 0
  %713 = vmatpush1.bf16.msra.mxu0 %v646
  %714 = vmatprep.subr.bf16.mxu0 0
  %715 = vmatpush1.bf16.msra.mxu0 %v649
  %716 = vmatprep.subr.bf16.mxu0 0
  %717 = vmatpush1.bf16.msra.mxu0 %v652
  %718 = vmatprep.subr.bf16.mxu0 0
  %719 = vmatpush1.bf16.msra.mxu0 0
  %720 = vmatprep.subr.bf16.mxu0 0
  %721 = vmatpush1.bf16.msra.mxu0 0
  %722 = vmatprep.subr.bf16.mxu0 0
  %723 = vmatpush1.bf16.msra.mxu0 0
  %724 = vmatprep.subr.bf16.mxu0 0
  %725 = vmatpush1.bf16.msra.mxu0 0
  %726 = vmatprep.subr.bf16.mxu0 0
  %727 = vmatpush1.bf16.msra.mxu0 0
  %728 = vmatprep.subr.bf16.mxu0 0
  %729 = vmatpush1.bf16.msra.mxu0 0
  %730 = vmatprep.subr.bf16.mxu0 0
  %731 = vmatpush1.bf16.msra.mxu0 0
  %732 = vmatprep.subr.bf16.mxu0 0
  %733 = vmatpush1.bf16.msra.mxu0 0
  %734 = vmatprep.subr.bf16.mxu0 0
  %735 = vmatpush1.bf16.msra.mxu0 0
  %736 = vmatprep.subr.bf16.mxu0 0
  %737 = vmatpush1.bf16.msra.mxu0 0
  %738 = vmatprep.subr.bf16.mxu0 0
  %739 = vmatpush1.bf16.msra.mxu0 0
  %740 = vmatprep.subr.bf16.mxu0 0
  %741 = vmatpush1.bf16.msra.mxu0 0
  %742 = vmatprep.mubr.bf16.mxu0 0
  %743 = vmatmul.mubr.bf16.gmra.mrb[0].mxu0 %v667
  %v744 = vpop.f32.mrb[0].mxu0
  %v745 = vadd.f32 %v600, %v744
  %v746 = vpop.f32.mrb[0].mxu0
  %v747 = vpop.f32.mrb[0].mxu0
  %v748 = vpop.f32.mrb[0].mxu0
  %749 = vdwg.mxu0
  %v753 = vcombine.low %v704, %v706
  %v755 = vunpack.c.l.s4 1983009808
  %v756 = vunpack.c.0.s8 %v755
  %v757 = vlaneseq
  %v758 = vshrl.u32 %v757, 7
  %v759 = vsub.s32 %v756, %v758
  %v760 = vrot.slane %v753, %v759
  %v762 = vunpack.c.l.s4 1983009808
  %v763 = vunpack.c.0.s8 %v762
  %v764 = vlaneseq
  %v765 = vshrl.u32 %v764, 7
  %v766 = vsub.s32 %v763, %v765
  %v767 = vrot.slane %v745, %v766
  %v768 = vcombine.low %v760, %v767
  %vm770 = vcmask 1041408
  %vm771 = vcmask 1043458
  %vm772 = vmor %vm771, %vm770
  %vm773 = vcmask 95236
  %vm774 = vmor %vm773, %vm772
  %775 = vst.msk [vmem:[%s3] sm:$0x3f] %vm774, %v768
  // Predicated region
  $region14: #{trans_recon_forward.1} parent=0 // pred_check
    _
  $region15: #{trans_recon_forward.1} parent=0 // pred_check_branch
    %777 = sbr.rel (0) target = $region17
  $region16: #{trans_recon_forward.1} parent=0 // pred_region
    _
  $region17: #{trans_recon_forward.1} parent=0 // pred_fallthru
    _
  // Predicated region
  $region18: #{trans_recon_forward.1} parent=0 // pred_check
    _
  $region19: #{trans_recon_forward.1} parent=0 // pred_check_branch
    %779 = sbr.rel (0) target = $region21
  $region20: #{trans_recon_forward.1} parent=0 // pred_region
    _
  $region21: #{trans_recon_forward.1} parent=0 // pred_fallthru
    _

</llo_original>
